<compile_context>
chip_gen: v7x
topology: tpu7x:2x2x1
jax: 0.10.0
libtpu: 0.0.40
codegen_flags: <defaults>
</compile_context>

<pallas_src>
import functools

import jax
import jax.numpy as jnp
from jax import lax
from jax.experimental import pallas as pl
from jax.experimental.pallas import tpu as pltpu
import numpy as np


# -----------------------------------------------------------------------------
# Fused attention kernel (one grid step per block of BB batch elements)
# -----------------------------------------------------------------------------
def _attention_kernel(loc_ref, q_ref, pm_ref, mem_ref, mask_ref,
                      wloc_ref, wq_ref, v_ref,
                      ctx_ref, attw_ref):
    # loc_ref : (BB, T, 2K)  im2col of attention_weights_cat   (compute dtype)
    # q_ref   : (BB, 1, R)   attention rnn hidden state        (compute dtype)
    # pm_ref  : (BB, T, D)   processed_memory                  (compute dtype)
    # mem_ref : (BB, T, E)   memory                            (compute dtype)
    # mask_ref: (BB, 1, T)   1.0 where padded, 0.0 where valid (f32)
    # wloc_ref: (2K, D)      fused location conv∘dense weight  (compute dtype)
    # wq_ref  : (R, D)       query projection weight (transposed)
    # v_ref   : (1, D)       energy projection vector          (f32)
    # ctx_ref : (BB, 1, E)   attention context out             (f32)
    # attw_ref: (BB, 1, T)   attention weights out, lane-dense (f32)
    BB, T, K2 = loc_ref.shape
    D = wloc_ref.shape[1]

    # Query projection: (BB, R) @ (R, D) -> (BB, D), f32 accumulation on the MXU.
    q = q_ref[...].reshape(BB, -1)
    qp = jnp.dot(q, wq_ref[...], preferred_element_type=jnp.float32)

    # Location branch: merge (BB, T) leading dims -> one MXU matmul with M = BB*T.
    loc2 = loc_ref[...].reshape(BB * T, K2)
    proc = jnp.dot(loc2, wloc_ref[...], preferred_element_type=jnp.float32)
    proc = proc.reshape(BB, T, D)

    # processed = loc + query (broadcast over T) + processed_memory, then
    # energies[b, t] = v . tanh(processed[b, t])  -> (BB, T), T on the lane axis.
    # TODO(synk): for very long T (>~512) chunk the T axis with an online softmax
    # to bound the live (BB, T, D) f32 intermediate.
    proc = proc + qp[:, None, :] + pm_ref[...].astype(jnp.float32)
    scores = jnp.sum(jnp.tanh(proc) * v_ref[...].astype(jnp.float32), axis=2)

    # masked_fill(-inf) and softmax over T (lane axis), all in f32.
    scores = jnp.where(mask_ref[...][:, 0, :] > 0.5, -jnp.inf, scores)
    m = jnp.max(scores, axis=1, keepdims=True)                       # (BB, 1)
    p = jnp.exp(scores - m)
    w = p * pl.reciprocal(jnp.sum(p, axis=1, keepdims=True), approx=True)
    attw_ref[...] = w[:, None, :]                                    # lane-dense store

    # context = attention_weights @ memory : batched (1, T) @ (T, E) on the MXU.
    ctx_ref[...] = jnp.einsum(
        "bqt,bte->bqe", w[:, None, :].astype(mem_ref.dtype), mem_ref[...],
        preferred_element_type=jnp.float32)


# -----------------------------------------------------------------------------
# Wrapper mirroring Attention.forward
# -----------------------------------------------------------------------------
def attention_forward(params, attention_hidden_state, memory, processed_memory,
                      attention_weights_cat, mask=None, attention_weights=None,
                      compute_dtype=jnp.bfloat16):
    """Returns (attention_context (B, E), attention_weights (B, T))."""
    if attention_weights is not None:
        # Rare pre-supplied-weights bypass stays in plain JAX.
        ctx = jnp.einsum("bt,bte->be", attention_weights, memory)
        return ctx, attention_weights

    B, T, E = memory.shape
    D = processed_memory.shape[-1]
    R = attention_hidden_state.shape[-1]
    conv_w = params["location_conv_w"]        # (F, 2, K)  Conv1d weight (bias=False)
    dense_w = params["location_dense_w"]      # (D, F)     Linear weight (bias=False)
    q_w = params["query_w"]                   # (D, R)     Linear weight (bias=False)
    v_w = params["v_w"]                       # (1, D)     Linear weight (bias=False)
    K = conv_w.shape[-1]
    pad = (K - 1) // 2                        # 'same' padding (odd K, as in Tacotron2)

    # ---- trace-time weight fusion: location conv ∘ dense -> one (2K, D) matrix
    w_loc = jnp.einsum("fck,df->kcd", conv_w, dense_w).reshape(K * 2, D)
    w_loc = w_loc.astype(compute_dtype)
    w_q = q_w.T.astype(compute_dtype)                                # (R, D)
    v_row = v_w.astype(jnp.float32)                                  # (1, D)

    # ---- im2col of attention_weights_cat (B, 2, T): slab[b,t,k*2+c] = x_pad[b,c,t+k]
    x_pad = jnp.pad(attention_weights_cat, ((0, 0), (0, 0), (pad, pad)))
    taps = [x_pad[:, :, k:k + T] for k in range(K)]                  # K x (B, 2, T)
    loc = jnp.stack(taps, axis=1)                                    # (B, K, 2, T)
    loc = jnp.transpose(loc, (0, 3, 1, 2)).reshape(B, T, K * 2)
    loc = loc.astype(compute_dtype)

    # No padding of D / E: BlockSpecs below use full trailing dims.
    pm = processed_memory.astype(compute_dtype)
    mem = memory.astype(compute_dtype)
    q3 = attention_hidden_state.reshape(B, 1, R).astype(compute_dtype)

    if mask is None:
        mask_f = jnp.zeros((B, 1, T), jnp.float32)
    else:
        mask_f = mask.astype(jnp.float32).reshape(B, 1, T)

    # ---- pick batch block BB (amortize grid-step overhead; keep VMEM residency sane)
    in_bytes = jnp.dtype(compute_dtype).itemsize
    def _per_step_bytes(bb):
        return bb * (T * (2 * K + D + E) * in_bytes + R * in_bytes + 2 * T * 4 + E * 4)
    BB = 1
    for cand in (8, 4, 2, 1):
        if B % cand:
            continue
        if 2 * _per_step_bytes(cand) <= 20 * 2 ** 20 or cand == 1:
            BB = cand
            break
    per = _per_step_bytes(BB)
    w_bytes = (2 * K * D + R * D) * in_bytes + D * 4
    vmem_limit = int(min(48 * 2 ** 20, max(16 * 2 ** 20, 4 * per + 2 * w_bytes + (2 << 20))))

    ctx, attw = pl.pallas_call(
        _attention_kernel,
        out_shape=(jax.ShapeDtypeStruct((B, 1, E), jnp.float32),
                   jax.ShapeDtypeStruct((B, 1, T), jnp.float32)),
        grid=(B // BB,),
        in_specs=[
            pl.BlockSpec((BB, T, 2 * K), lambda b: (b, 0, 0)),   # loc im2col
            pl.BlockSpec((BB, 1, R), lambda b: (b, 0, 0)),       # query
            pl.BlockSpec((BB, T, D), lambda b: (b, 0, 0)),       # processed_memory
            pl.BlockSpec((BB, T, E), lambda b: (b, 0, 0)),       # memory
            pl.BlockSpec((BB, 1, T), lambda b: (b, 0, 0)),       # mask (lane-dense)
            pl.BlockSpec((2 * K, D), lambda b: (0, 0)),          # fused location weight
            pl.BlockSpec((R, D), lambda b: (0, 0)),              # query weight
            pl.BlockSpec((1, D), lambda b: (0, 0)),              # v
        ],
        out_specs=(pl.BlockSpec((BB, 1, E), lambda b: (b, 0, 0)),
                   pl.BlockSpec((BB, 1, T), lambda b: (b, 0, 0))),
        compiler_params=pltpu.CompilerParams(
            dimension_semantics=("parallel",),
            vmem_limit_bytes=vmem_limit),
    )(loc, q3, pm, mem, mask_f, w_loc, w_q, v_row)

    return ctx[:, 0, :], attw[:, 0, :]


# -----------------------------------------------------------------------------
# Pure-JAX reference (mirrors the PyTorch module exactly, f32)
# -----------------------------------------------------------------------------
def _ref_attention(params, query, memory, processed_memory, att_cat, mask):
    conv_w = params["location_conv_w"]
    dense_w = params["location_dense_w"]
    q_w = params["query_w"]
    v_w = params["v_w"]
    K = conv_w.shape[-1]
    pad = (K - 1) // 2
    conv_out = lax.conv_general_dilated(
        att_cat, conv_w, window_strides=(1,), padding=[(pad, pad)],
        dimension_numbers=("NCH", "OIH", "NCH"))                     # (B, F, T)
    loc = jnp.transpose(conv_out, (0, 2, 1)) @ dense_w.T             # (B, T, D)
    qp = query @ q_w.T                                               # (B, D)
    proc = loc + qp[:, None, :] + processed_memory
    e = jnp.einsum("btd,d->bt", jnp.tanh(proc), v_w[0])
    if mask is not None:
        e = jnp.where(mask, -jnp.inf, e)
    w = jax.nn.softmax(e, axis=1)
    ctx = jnp.einsum("bt,bte->be", w, memory)
    return ctx, w


if __name__ == "__main__":
    # Small shapes consistent with the module's constructor arguments.
    B, T = 2, 16
    R, E, D = 32, 64, 32        # attention_rnn_dim, embedding_dim, attention_dim
    F, K = 8, 5                 # attention_location_n_filters / kernel_size

    key = jax.random.PRNGKey(0)
    ks = jax.random.split(key, 10)
    params = {
        "location_conv_w": 0.1 * jax.random.normal(ks[0], (F, 2, K), jnp.float32),
        "location_dense_w": 0.1 * jax.random.normal(ks[1], (D, F), jnp.float32),
        "query_w": 0.1 * jax.random.normal(ks[2], (D, R), jnp.float32),
        "v_w": 0.1 * jax.random.normal(ks[3], (1, D), jnp.float32),
    }
    query = jax.random.normal(ks[4], (B, R), jnp.float32)
    memory = jax.random.normal(ks[5], (B, T, E), jnp.float32)
    processed_memory = jax.random.normal(ks[6], (B, T, D), jnp.float32)
    prev = jax.nn.softmax(jax.random.normal(ks[7], (B, T), jnp.float32), axis=-1)
    attention_weights_cat = jnp.stack([prev, jnp.cumsum(prev, axis=-1)], axis=1)  # (B,2,T)
    lengths = jnp.array([16, 11], jnp.int32)
    mask = jnp.arange(T)[None, :] >= lengths[:, None]                # True = padded

    ref_ctx, ref_w = _ref_attention(params, query, memory, processed_memory,
                                    attention_weights_cat, mask)

    # --- f32 path: tight numerical check of the fused kernel structure.
    fwd_f32 = jax.jit(functools.partial(attention_forward, compute_dtype=jnp.float32))
    ctx, attw = fwd_f32(params, query, memory, processed_memory,
                        attention_weights_cat, mask)
    ctx = jax.block_until_ready(ctx)
    attw = jax.block_until_ready(attw)
    assert ctx.shape == (B, E), ctx.shape
    assert attw.shape == (B, T), attw.shape
    np.testing.assert_allclose(np.asarray(attw), np.asarray(ref_w), rtol=1e-3, atol=1e-5)
    np.testing.assert_allclose(np.asarray(ctx), np.asarray(ref_ctx), rtol=1e-3, atol=1e-4)
    # masked (padded) positions must get exactly zero attention; rows ~sum to 1
    assert float(jnp.abs(attw[1, 11:]).max()) == 0.0
    np.testing.assert_allclose(np.asarray(attw.sum(axis=1)), np.ones(B), atol=2e-3)

    # --- bf16 fast path (default): looser tolerance vs. the f32 reference.
    ctx16, attw16 = jax.jit(attention_forward)(
        params, query, memory, processed_memory, attention_weights_cat, mask)
    ctx16 = jax.block_until_ready(ctx16)
    attw16 = jax.block_until_ready(attw16)
    np.testing.assert_allclose(np.asarray(attw16), np.asarray(ref_w), rtol=2e-2, atol=2e-2)
    np.testing.assert_allclose(np.asarray(ctx16), np.asarray(ref_ctx), rtol=5e-2, atol=5e-2)
    assert float(jnp.abs(attw16[1, 11:]).max()) == 0.0
    np.testing.assert_allclose(np.asarray(attw16.sum(axis=1)), np.ones(B), atol=5e-3)

    print("KERNEL_OK")
</pallas_src>

<mosaic_0001>
module attributes {stable_mosaic.version = 11 : i64} {
  func.func @_attention_kernel(%arg0: i32, %arg1: memref<2x16x10xf32, #tpu.memory_space<vmem>>, %arg2: memref<2x1x32xf32, #tpu.memory_space<vmem>>, %arg3: memref<2x16x32xf32, #tpu.memory_space<vmem>>, %arg4: memref<2x16x64xf32, #tpu.memory_space<vmem>>, %arg5: memref<2x1x16xf32, #tpu.memory_space<vmem>>, %arg6: memref<10x32xf32, #tpu.memory_space<vmem>>, %arg7: memref<32x32xf32, #tpu.memory_space<vmem>>, %arg8: memref<1x32xf32, #tpu.memory_space<vmem>>, %arg9: memref<2x1x64xf32, #tpu.memory_space<vmem>>, %arg10: memref<2x1x16xf32, #tpu.memory_space<vmem>>) attributes {dimension_semantics = [#tpu.dimension_semantics<parallel>], iteration_bounds = array<i64: 1>, scalar_prefetch = 0 : i64, scratch_operands = 0 : i64, tpu.core_type = #tpu.core_type<tc>, window_params = [{transform_indices = @transform_0, window_bounds = array<i64: 2, 16, 10>}, {transform_indices = @transform_1, window_bounds = array<i64: 2, 1, 32>}, {transform_indices = @transform_2, window_bounds = array<i64: 2, 16, 32>}, {transform_indices = @transform_3, window_bounds = array<i64: 2, 16, 64>}, {transform_indices = @transform_4, window_bounds = array<i64: 2, 1, 16>}, {pipeline_mode = #tpu.pipeline_mode<synchronous>, transform_indices = @transform_5, window_bounds = array<i64: 10, 32>}, {pipeline_mode = #tpu.pipeline_mode<synchronous>, transform_indices = @transform_6, window_bounds = array<i64: 32, 32>}, {pipeline_mode = #tpu.pipeline_mode<synchronous>, transform_indices = @transform_7, window_bounds = array<i64: 1, 32>}, {transform_indices = @transform_8, window_bounds = array<i64: 2, 1, 64>}, {transform_indices = @transform_9, window_bounds = array<i64: 2, 1, 16>}]} {
    %c0 = arith.constant 0 : index
    %c0_0 = arith.constant 0 : index
    %c0_1 = arith.constant 0 : index
    %0 = vector.load %arg2[%c0, %c0_0, %c0_1] : memref<2x1x32xf32, #tpu.memory_space<vmem>>, vector<2x1x32xf32>
    %1 = vector.shape_cast %0 : vector<2x1x32xf32> to vector<2x32xf32>
    %c0_2 = arith.constant 0 : index
    %c0_3 = arith.constant 0 : index
    %2 = vector.load %arg7[%c0_2, %c0_3] : memref<32x32xf32, #tpu.memory_space<vmem>>, vector<32x32xf32>
    %cst = arith.constant dense<0.000000e+00> : vector<2x32xf32>
    %3 = tpu.matmul %1, %2, %cst {dimension_numbers = #tpu.dot_dimension_numbers<[1], [0], [0], [1], [0, 0, 1, 1], [], []>} : vector<2x32xf32>, vector<32x32xf32>, vector<2x32xf32> -> vector<2x32xf32>
    %c0_4 = arith.constant 0 : index
    %c0_5 = arith.constant 0 : index
    %c0_6 = arith.constant 0 : index
    %4 = vector.load %arg1[%c0_4, %c0_5, %c0_6] : memref<2x16x10xf32, #tpu.memory_space<vmem>>, vector<2x16x10xf32>
    %5 = vector.shape_cast %4 : vector<2x16x10xf32> to vector<32x10xf32>
    %c0_7 = arith.constant 0 : index
    %c0_8 = arith.constant 0 : index
    %6 = vector.load %arg6[%c0_7, %c0_8] : memref<10x32xf32, #tpu.memory_space<vmem>>, vector<10x32xf32>
    %cst_9 = arith.constant dense<0.000000e+00> : vector<32x32xf32>
    %7 = tpu.matmul %5, %6, %cst_9 {dimension_numbers = #tpu.dot_dimension_numbers<[1], [0], [0], [1], [0, 0, 1, 1], [], []>} : vector<32x10xf32>, vector<10x32xf32>, vector<32x32xf32> -> vector<32x32xf32>
    %8 = vector.shape_cast %7 : vector<32x32xf32> to vector<2x16x32xf32>
    %9 = vector.shape_cast %3 : vector<2x32xf32> to vector<2x1x32xf32>
    %10 = vector.broadcast %9 : vector<2x1x32xf32> to vector<2x16x32xf32>
    %11 = arith.addf %8, %10 : vector<2x16x32xf32>
    %c0_10 = arith.constant 0 : index
    %c0_11 = arith.constant 0 : index
    %c0_12 = arith.constant 0 : index
    %12 = vector.load %arg3[%c0_10, %c0_11, %c0_12] : memref<2x16x32xf32, #tpu.memory_space<vmem>>, vector<2x16x32xf32>
    %13 = arith.addf %11, %12 : vector<2x16x32xf32>
    %14 = math.tanh %13 : vector<2x16x32xf32>
    %c0_13 = arith.constant 0 : index
    %c0_14 = arith.constant 0 : index
    %15 = vector.load %arg8[%c0_13, %c0_14] : memref<1x32xf32, #tpu.memory_space<vmem>>, vector<1x32xf32>
    %16 = vector.shape_cast %15 : vector<1x32xf32> to vector<1x1x32xf32>
    %17 = vector.broadcast %16 : vector<1x1x32xf32> to vector<2x16x32xf32>
    %18 = arith.mulf %14, %17 : vector<2x16x32xf32>
    %cst_15 = arith.constant dense<0.000000e+00> : vector<2x16xf32>
    %19 = vector.multi_reduction <add>, %18, %cst_15 [2] : vector<2x16x32xf32> to vector<2x16xf32>
    %c0_16 = arith.constant 0 : index
    %c0_17 = arith.constant 0 : index
    %c0_18 = arith.constant 0 : index
    %20 = vector.load %arg5[%c0_16, %c0_17, %c0_18] : memref<2x1x16xf32, #tpu.memory_space<vmem>>, vector<2x1x16xf32>
    %21 = vector.shape_cast %20 : vector<2x1x16xf32> to vector<2x16xf32>
    %cst_19 = arith.constant 5.000000e-01 : f32
    %22 = vector.broadcast %cst_19 : f32 to vector<2x16xf32>
    %23 = arith.cmpf ogt, %21, %22 : vector<2x16xf32>
    %cst_20 = arith.constant 0xFF800000 : f32
    %24 = vector.broadcast %cst_20 : f32 to vector<2x16xf32>
    %25 = arith.select %23, %24, %19 : vector<2x16xi1>, vector<2x16xf32>
    %cst_21 = arith.constant dense<0xFF800000> : vector<2xf32>
    %26 = vector.multi_reduction <maximumf>, %25, %cst_21 [1] : vector<2x16xf32> to vector<2xf32>
    %27 = vector.shape_cast %26 : vector<2xf32> to vector<2x1xf32>
    %28 = vector.broadcast %27 : vector<2x1xf32> to vector<2x16xf32>
    %29 = arith.subf %25, %28 : vector<2x16xf32>
    %30 = math.exp %29 : vector<2x16xf32>
    %cst_22 = arith.constant dense<0.000000e+00> : vector<2xf32>
    %31 = vector.multi_reduction <add>, %30, %cst_22 [1] : vector<2x16xf32> to vector<2xf32>
    %32 = vector.shape_cast %31 : vector<2xf32> to vector<2x1xf32>
    %33 = tpu.reciprocal %32 {approx = true} : vector<2x1xf32> -> vector<2x1xf32>
    %34 = vector.broadcast %33 : vector<2x1xf32> to vector<2x16xf32>
    %35 = arith.mulf %30, %34 : vector<2x16xf32>
    %36 = vector.shape_cast %35 : vector<2x16xf32> to vector<2x1x16xf32>
    %c0_23 = arith.constant 0 : index
    %c0_24 = arith.constant 0 : index
    %c0_25 = arith.constant 0 : index
    %37 = vector.load %arg10[%c0_23, %c0_24, %c0_25] : memref<2x1x16xf32, #tpu.memory_space<vmem>>, vector<2x1x16xf32>
    tpu.vector_store %arg10[%c0_23, %c0_24, %c0_25], %36 {strides = array<i32>} : memref<2x1x16xf32, #tpu.memory_space<vmem>>, vector<2x1x16xf32>,
    %38 = vector.shape_cast %35 : vector<2x16xf32> to vector<2x1x16xf32>
    %c0_26 = arith.constant 0 : index
    %c0_27 = arith.constant 0 : index
    %c0_28 = arith.constant 0 : index
    %39 = vector.load %arg4[%c0_26, %c0_27, %c0_28] : memref<2x16x64xf32, #tpu.memory_space<vmem>>, vector<2x16x64xf32>
    "tpu.trace_start"() <{level = 10 : i32, message = "bqt,bte->bqe"}> : () -> ()
    %cst_29 = arith.constant dense<0.000000e+00> : vector<2x1x64xf32>
    %40 = tpu.matmul %38, %39, %cst_29 {dimension_numbers = #tpu.dot_dimension_numbers<[2], [1], [1], [2], [0, 0, 0, 1, 1, 2], [0], [0]>} : vector<2x1x16xf32>, vector<2x16x64xf32>, vector<2x1x64xf32> -> vector<2x1x64xf32>
    "tpu.trace_stop"() : () -> ()
    %c0_30 = arith.constant 0 : index
    %c0_31 = arith.constant 0 : index
    %c0_32 = arith.constant 0 : index
    %41 = vector.load %arg9[%c0_30, %c0_31, %c0_32] : memref<2x1x64xf32, #tpu.memory_space<vmem>>, vector<2x1x64xf32>
    tpu.vector_store %arg9[%c0_30, %c0_31, %c0_32], %40 {strides = array<i32>} : memref<2x1x64xf32, #tpu.memory_space<vmem>>, vector<2x1x64xf32>,
    return
  }
  func.func @transform_0(%arg0: i32) -> (i32, i32, i32) {
    %c0_i32 = arith.constant 0 : i32
    %c0_i32_0 = arith.constant 0 : i32
    %c0_i32_1 = arith.constant 0 : i32
    return %arg0, %c0_i32, %c0_i32_0 : i32, i32, i32
  }
  func.func @transform_1(%arg0: i32) -> (i32, i32, i32) {
    %c0_i32 = arith.constant 0 : i32
    %c0_i32_0 = arith.constant 0 : i32
    %c0_i32_1 = arith.constant 0 : i32
    return %arg0, %c0_i32, %c0_i32_0 : i32, i32, i32
  }
  func.func @transform_2(%arg0: i32) -> (i32, i32, i32) {
    %c0_i32 = arith.constant 0 : i32
    %c0_i32_0 = arith.constant 0 : i32
    %c0_i32_1 = arith.constant 0 : i32
    return %arg0, %c0_i32, %c0_i32_0 : i32, i32, i32
  }
  func.func @transform_3(%arg0: i32) -> (i32, i32, i32) {
    %c0_i32 = arith.constant 0 : i32
    %c0_i32_0 = arith.constant 0 : i32
    %c0_i32_1 = arith.constant 0 : i32
    return %arg0, %c0_i32, %c0_i32_0 : i32, i32, i32
  }
  func.func @transform_4(%arg0: i32) -> (i32, i32, i32) {
    %c0_i32 = arith.constant 0 : i32
    %c0_i32_0 = arith.constant 0 : i32
    %c0_i32_1 = arith.constant 0 : i32
    return %arg0, %c0_i32, %c0_i32_0 : i32, i32, i32
  }
  func.func @transform_5(%arg0: i32) -> (i32, i32) {
    %c0_i32 = arith.constant 0 : i32
    %c0_i32_0 = arith.constant 0 : i32
    %c0_i32_1 = arith.constant 0 : i32
    return %c0_i32, %c0_i32_0 : i32, i32
  }
  func.func @transform_6(%arg0: i32) -> (i32, i32) {
    %c0_i32 = arith.constant 0 : i32
    %c0_i32_0 = arith.constant 0 : i32
    %c0_i32_1 = arith.constant 0 : i32
    return %c0_i32, %c0_i32_0 : i32, i32
  }
  func.func @transform_7(%arg0: i32) -> (i32, i32) {
    %c0_i32 = arith.constant 0 : i32
    %c0_i32_0 = arith.constant 0 : i32
    %c0_i32_1 = arith.constant 0 : i32
    return %c0_i32, %c0_i32_0 : i32, i32
  }
  func.func @transform_8(%arg0: i32) -> (i32, i32, i32) {
    %c0_i32 = arith.constant 0 : i32
    %c0_i32_0 = arith.constant 0 : i32
    %c0_i32_1 = arith.constant 0 : i32
    return %arg0, %c0_i32, %c0_i32_0 : i32, i32, i32
  }
  func.func @transform_9(%arg0: i32) -> (i32, i32, i32) {
    %c0_i32 = arith.constant 0 : i32
    %c0_i32_0 = arith.constant 0 : i32
    %c0_i32_1 = arith.constant 0 : i32
    return %arg0, %c0_i32, %c0_i32_0 : i32, i32, i32
  }
}

</mosaic_0001>

<llo_original>
// kernel: attention_forward.1
$region0: #{attention_forward.1}
  #allocation0 [shape = 'u32[]', space=smem, size = 0x4, offset = 0x4, fixed_abs, tag = 'smem constant byte address 0x4 - core index']
  #allocation1 [shape = 'u32[144,128]{1,0:T(1,128)}', space=vmem, size = 0x12000, scoped, tag = 'internal scratch']
  %s0 = inlined_call_operand.vmem [shape: f32[2,16,10], index: 0, kind: input, shape index: {}]
  %s1 = inlined_call_operand.vmem [shape: f32[2,1,32], index: 1, kind: input, shape index: {}]
  %s2 = inlined_call_operand.vmem [shape: f32[2,16,32], index: 2, kind: input, shape index: {}]
  %s3 = inlined_call_operand.vmem [shape: f32[2,16,64], index: 3, kind: input, shape index: {}]
  %s4 = inlined_call_operand.vmem [shape: f32[2,1,16], index: 4, kind: input, shape index: {}]
  %s5 = inlined_call_operand.vmem [shape: f32[10,32], index: 5, kind: input, shape index: {}]
  %s6 = inlined_call_operand.vmem [shape: f32[32,32], index: 6, kind: input, shape index: {}]
  %s7 = inlined_call_operand.vmem [shape: f32[1,32], index: 7, kind: input, shape index: {}]
  %s8 = inlined_call_operand.hbm [shape: f32[2,1,64], index: 8, kind: output, shape index: {0}]
  %s9 = inlined_call_operand.hbm [shape: f32[2,1,16], index: 9, kind: output, shape index: {1}]
  %10 = xla_tuple %s8, %s9
  %s11 = sld [smem:[#allocation0]]
  $region50: #{attention_forward.1} parent=0
    _
  %s13 = ssub.s32 1, %s11
  %s14 = scalar_select 0, %s13, %s11
  $region1: #{attention_forward.1} parent=0
    #allocation2 [shape = 'u8[1024]{0}', space=vmem, size = 0x400, scoped, tag = 'output window, operand 0, single buffered']
    #allocation3 [shape = 's32[1]{0}', space=sflag, size = 0x4, scoped, tag = 'scoped memory for attention_forward.1']
    #allocation4 [shape = 'u8[1024]{0}', space=vmem, size = 0x400, scoped, tag = 'output window, operand 1, single buffered']
    #allocation5 [shape = 's32[1]{0}', space=sflag, size = 0x4, scoped, tag = 'scoped memory for attention_forward.1']
    %15 = vsyncpa [#allocation3], 0
    %16 = vsyncpa [#allocation5], 0
    // Predicated region
    $region2: #{attention_forward.1} parent=1 // pred_check
      _
    $region3: #{attention_forward.1} parent=1 // pred_check_branch
      %18 = sbr.rel (0) target = $region5
    $region4: #{attention_forward.1} parent=1 // pred_region
      _
    $region5: #{attention_forward.1} parent=1 // pred_fallthru
      _
    // Predicated region
    $region6: #{attention_forward.1} parent=1 // pred_check
      _
    $region7: #{attention_forward.1} parent=1 // pred_check_branch
      %20 = sbr.rel (0) target = $region9
    $region8: #{attention_forward.1} parent=1 // pred_region
      _
    $region9: #{attention_forward.1} parent=1 // pred_fallthru
      _
    // Predicated region
    $region10: #{attention_forward.1} parent=1 // pred_check
      _
    $region11: #{attention_forward.1} parent=1 // pred_check_branch
      %22 = sbr.rel (0) target = $region13
    $region12: #{attention_forward.1} parent=1 // pred_region
      _
    $region13: #{attention_forward.1} parent=1 // pred_fallthru
      _
    // Predicated region
    $region14: #{attention_forward.1} parent=1 // pred_check
      _
    $region15: #{attention_forward.1} parent=1 // pred_check_branch
      %24 = sbr.rel (0) target = $region17
    $region16: #{attention_forward.1} parent=1 // pred_region
      _
    $region17: #{attention_forward.1} parent=1 // pred_fallthru
      _
    // Predicated region
    $region18: #{attention_forward.1} parent=1 // pred_check
      _
    $region19: #{attention_forward.1} parent=1 // pred_check_branch
      %26 = sbr.rel (0) target = $region21
    $region20: #{attention_forward.1} parent=1 // pred_region
      _
    $region21: #{attention_forward.1} parent=1 // pred_fallthru
      _
    // Predicated region
    $region22: #{attention_forward.1} parent=1 // pred_check
      _
    $region23: #{attention_forward.1} parent=1 // pred_check_branch
      %28 = sbr.rel (0) target = $region25
    $region24: #{attention_forward.1} parent=1 // pred_region
      _
    $region25: #{attention_forward.1} parent=1 // pred_fallthru
      _
    // Predicated region
    $region26: #{attention_forward.1} parent=1 // pred_check
      _
    $region27: #{attention_forward.1} parent=1 // pred_check_branch
      %30 = sbr.rel (0) target = $region29
    $region28: #{attention_forward.1} parent=1 // pred_region
      _
    $region29: #{attention_forward.1} parent=1 // pred_fallthru
      _
    // Predicated region
    $region30: #{attention_forward.1} parent=1 // pred_check
      _
    $region31: #{attention_forward.1} parent=1 // pred_check_branch
      %32 = sbr.rel (0) target = $region33
    $region32: #{attention_forward.1} parent=1 // pred_region
      _
    $region33: #{attention_forward.1} parent=1 // pred_fallthru
      _
    %v33 = vld [vmem:[%s1] sm:$0x1]
    %v34 = vld [vmem:[%s1 + $0x1] sm:$0x1]
    %v35 = vld [vmem:[%s6] sm:$0xff]
    %v36 = vld [vmem:[%s6 + $0x8] sm:$0xff]
    %v37 = vld [vmem:[%s6 + $0x10] sm:$0xff]
    %v38 = vld [vmem:[%s6 + $0x18] sm:$0xff]
    %v41 = vcombine.low %v33, %v34
    %v43 = vunpack.c.l.s4 1966171168
    %v44 = vunpack.c.0.s8 %v43
    %v45 = vlaneseq
    %v46 = vshrl.u32 %v45, 7
    %v47 = vsub.s32 %v44, %v46
    %v48 = vrot.slane %v41, %v47
    %v50 = vunpack.c.l.s4 1966171168
    %v51 = vunpack.c.0.s8 %v50
    %v52 = vlaneseq
    %v53 = vshrl.u32 %v52, 7
    %v54 = vsub.s32 %v51, %v53
    %v55 = vrot.slane %v48, %v54
    %vm56 = vcmask 261120
    %v57 = vsel %vm56, %v55, 0
    %59 = vmatprep.subr.mxu0 0.0
    %60 = vmatpush1.msra.mxu0 %v35
    %61 = vmatprep.subr.mxu0 0.0
    %62 = vmatpush1.msra.mxu0 %v36
    %63 = vmatprep.subr.mxu0 0.0
    %64 = vmatpush1.msra.mxu0 %v37
    %65 = vmatprep.subr.mxu0 0.0
    %66 = vmatpush1.msra.mxu0 %v38
    %67 = vmatprep.subr.mxu0 0.0
    %68 = vmatpush1.msra.mxu0 0.0
    %69 = vmatprep.subr.mxu0 0.0
    %70 = vmatpush1.msra.mxu0 0.0
    %71 = vmatprep.subr.mxu0 0.0
    %72 = vmatpush1.msra.mxu0 0.0
    %73 = vmatprep.subr.mxu0 0.0
    %74 = vmatpush1.msra.mxu0 0.0
    %75 = vmatprep.subr.mxu0 0.0
    %76 = vmatpush1.msra.mxu0 0.0
    %77 = vmatprep.subr.mxu0 0.0
    %78 = vmatpush1.msra.mxu0 0.0
    %79 = vmatprep.subr.mxu0 0.0
    %80 = vmatpush1.msra.mxu0 0.0
    %81 = vmatprep.subr.mxu0 0.0
    %82 = vmatpush1.msra.mxu0 0.0
    %83 = vmatprep.subr.mxu0 0.0
    %84 = vmatpush1.msra.mxu0 0.0
    %85 = vmatprep.subr.mxu0 0.0
    %86 = vmatpush1.msra.mxu0 0.0
    %87 = vmatprep.subr.mxu0 0.0
    %88 = vmatpush1.msra.mxu0 0.0
    %89 = vmatprep.subr.mxu0 0.0
    %90 = vmatpush1.msra.mxu0 0.0
    %91 = vmatprep.subr.mxu0 0.0
    %92 = vmatpush1.msra.mxu0 0.0
    %93 = vmatprep.subr.mxu0 0.0
    %94 = vmatpush1.msra.mxu0 0.0
    %95 = vmatprep.subr.mxu0 0.0
    %96 = vmatpush1.msra.mxu0 0.0
    %97 = vmatprep.subr.mxu0 0.0
    %98 = vmatpush1.msra.mxu0 0.0
    %99 = vmatprep.subr.mxu0 0.0
    %100 = vmatpush1.msra.mxu0 0.0
    %101 = vmatprep.subr.mxu0 0.0
    %102 = vmatpush1.msra.mxu0 0.0
    %103 = vmatprep.subr.mxu0 0.0
    %104 = vmatpush1.msra.mxu0 0.0
    %105 = vmatprep.subr.mxu0 0.0
    %106 = vmatpush1.msra.mxu0 0.0
    %107 = vmatprep.subr.mxu0 0.0
    %108 = vmatpush1.msra.mxu0 0.0
    %109 = vmatprep.subr.mxu0 0.0
    %110 = vmatpush1.msra.mxu0 0.0
    %111 = vmatprep.subr.mxu0 0.0
    %112 = vmatpush1.msra.mxu0 0.0
    %113 = vmatprep.subr.mxu0 0.0
    %114 = vmatpush1.msra.mxu0 0.0
    %115 = vmatprep.subr.mxu0 0.0
    %116 = vmatpush1.msra.mxu0 0.0
    %117 = vmatprep.subr.mxu0 0.0
    %118 = vmatpush1.msra.mxu0 0.0
    %119 = vmatprep.subr.mxu0 0.0
    %120 = vmatpush1.msra.mxu0 0.0
    %121 = vmatprep.subr.mxu0 0.0
    %122 = vmatpush1.msra.mxu0 0.0
    %123 = vmatprep.mubr.f32.mxu0 0.0
    %124 = vmatmul.mubr.f32.gmra.mrb[0].mxu0 %v57
    %v125 = vpop.f32.mrb[0].mxu0
    %v126 = vadd.f32 0.0, %v125
    %v127 = vpop.f32.mrb[0].mxu0
    %128 = vdwg.mxu0
    %v129 = vld [vmem:[%s0] sm:$0xff]
    %v130 = vld [vmem:[%s0 + $0x8] sm:$0xff]
    %v131 = vld [vmem:[%s0 + $0x10] sm:$0xff]
    %v132 = vld [vmem:[%s0 + $0x18] sm:$0xff]
    %v133 = vld [vmem:[%s5] sm:$0xff]
    %v134 = vld [vmem:[%s5 + $0x8] sm:$0x3]
    %vm135 = vcmask 80896
    %v137 = vsel %vm135, %v129, 0
    %v140 = vsel %vm135, %v130, 0
    %v143 = vsel %vm135, %v131, 0
    %v146 = vsel %vm135, %v132, 0
    %vm148 = vcmask 1041408
    %v150 = vsel %vm148, %v134, 0
    %152 = vmatprep.subr.mxu0 0.0
    %153 = vmatpush1.msra.mxu0 %v133
    %154 = vmatprep.subr.mxu0 0.0
    %155 = vmatpush1.msra.mxu0 %v150
    %156 = vmatprep.subr.mxu0 0.0
    %157 = vmatpush1.msra.mxu0 0.0
    %158 = vmatprep.subr.mxu0 0.0
    %159 = vmatpush1.msra.mxu0 0.0
    %160 = vmatprep.subr.mxu0 0.0
    %161 = vmatpush1.msra.mxu0 0.0
    %162 = vmatprep.subr.mxu0 0.0
    %163 = vmatpush1.msra.mxu0 0.0
    %164 = vmatprep.subr.mxu0 0.0
    %165 = vmatpush1.msra.mxu0 0.0
    %166 = vmatprep.subr.mxu0 0.0
    %167 = vmatpush1.msra.mxu0 0.0
    %168 = vmatprep.subr.mxu0 0.0
    %169 = vmatpush1.msra.mxu0 0.0
    %170 = vmatprep.subr.mxu0 0.0
    %171 = vmatpush1.msra.mxu0 0.0
    %172 = vmatprep.subr.mxu0 0.0
    %173 = vmatpush1.msra.mxu0 0.0
    %174 = vmatprep.subr.mxu0 0.0
    %175 = vmatpush1.msra.mxu0 0.0
    %176 = vmatprep.subr.mxu0 0.0
    %177 = vmatpush1.msra.mxu0 0.0
    %178 = vmatprep.subr.mxu0 0.0
    %179 = vmatpush1.msra.mxu0 0.0
    %180 = vmatprep.subr.mxu0 0.0
    %181 = vmatpush1.msra.mxu0 0.0
    %182 = vmatprep.subr.mxu0 0.0
    %183 = vmatpush1.msra.mxu0 0.0
    %184 = vmatprep.subr.mxu0 0.0
    %185 = vmatpush1.msra.mxu0 0.0
    %186 = vmatprep.subr.mxu0 0.0
    %187 = vmatpush1.msra.mxu0 0.0
    %188 = vmatprep.subr.mxu0 0.0
    %189 = vmatpush1.msra.mxu0 0.0
    %190 = vmatprep.subr.mxu0 0.0
    %191 = vmatpush1.msra.mxu0 0.0
    %192 = vmatprep.subr.mxu0 0.0
    %193 = vmatpush1.msra.mxu0 0.0
    %194 = vmatprep.subr.mxu0 0.0
    %195 = vmatpush1.msra.mxu0 0.0
    %196 = vmatprep.subr.mxu0 0.0
    %197 = vmatpush1.msra.mxu0 0.0
    %198 = vmatprep.subr.mxu0 0.0
    %199 = vmatpush1.msra.mxu0 0.0
    %200 = vmatprep.subr.mxu0 0.0
    %201 = vmatpush1.msra.mxu0 0.0
    %202 = vmatprep.subr.mxu0 0.0
    %203 = vmatpush1.msra.mxu0 0.0
    %204 = vmatprep.subr.mxu0 0.0
    %205 = vmatpush1.msra.mxu0 0.0
    %206 = vmatprep.subr.mxu0 0.0
    %207 = vmatpush1.msra.mxu0 0.0
    %208 = vmatprep.subr.mxu0 0.0
    %209 = vmatpush1.msra.mxu0 0.0
    %210 = vmatprep.subr.mxu0 0.0
    %211 = vmatpush1.msra.mxu0 0.0
    %212 = vmatprep.subr.mxu0 0.0
    %213 = vmatpush1.msra.mxu0 0.0
    %214 = vmatprep.subr.mxu0 0.0
    %215 = vmatpush1.msra.mxu0 0.0
    %216 = vmatprep.mubr.f32.mxu0 0.0
    %217 = vmatmul.mubr.f32.gmra.mrb[0].mxu0 %v137
    %v218 = vpop.f32.mrb[0].mxu0
    %v219 = vadd.f32 0.0, %v218
    %v220 = vpop.f32.mrb[0].mxu0
    %221 = vmatprep.mubr.f32.mxu0 0.0
    %222 = vmatmul.mubr.f32.gmra.mrb[0].mxu0 %v140
    %v223 = vpop.f32.mrb[0].mxu0
    %v224 = vadd.f32 0.0, %v223
    %v225 = vpop.f32.mrb[0].mxu0
    %226 = vmatprep.mubr.f32.mxu0 0.0
    %227 = vmatmul.mubr.f32.gmra.mrb[0].mxu0 %v143
    %v228 = vpop.f32.mrb[0].mxu0
    %v229 = vadd.f32 0.0, %v228
    %v230 = vpop.f32.mrb[0].mxu0
    %231 = vmatprep.mubr.f32.mxu0 0.0
    %232 = vmatmul.mubr.f32.gmra.mrb[0].mxu0 %v146
    %v233 = vpop.f32.mrb[0].mxu0
    %v234 = vadd.f32 0.0, %v233
    %v235 = vpop.f32.mrb[0].mxu0
    %236 = vdwg.mxu0
    %v239 = vunpack.c.l.s4 1966171168
    %v240 = vunpack.c.0.s8 %v239
    %v241 = vlaneseq
    %v242 = vshrl.u32 %v241, 7
    %v243 = vsub.s32 %v240, %v242
    %v244 = vrot.slane %v126, %v243
    %v245 = vcombine.high %v244, %v244
    %v247 = vunpack.c.l.s4 1966171168
    %v248 = vunpack.c.0.s8 %v247
    %v249 = vlaneseq
    %v250 = vshrl.u32 %v249, 7
    %v251 = vsub.s32 %v248, %v250
    %v252 = vrot.slane %v244, %v251
    %v254 = vunpack.c.l.s4 1966171168
    %v255 = vunpack.c.0.s8 %v254
    %v256 = vlaneseq
    %v257 = vshrl.u32 %v256, 7
    %v258 = vsub.s32 %v255, %v257
    %v259 = vrot.slane %v245, %v258
    %v260 = vlaneseq
    %v261 = vshrl.u32 %v260, 7
    %v262 = vsub.s32 0, %v261
    %v263 = vrot.slane %v252, %v262
    %v264 = vlaneseq
    %v265 = vshrl.u32 %v264, 7
    %v266 = vsub.s32 0, %v265
    %v267 = vrot.slane %v259, %v266
    %v270 = vadd.f32 %v219, %v263
    %v271 = vadd.f32 %v224, %v263
    %v272 = vadd.f32 %v229, %v267
    %v273 = vadd.f32 %v234, %v267
    %v274 = vld [vmem:[%s2] sm:$0xff]
    %v275 = vld [vmem:[%s2 + $0x8] sm:$0xff]
    %v276 = vld [vmem:[%s2 + $0x10] sm:$0xff]
    %v277 = vld [vmem:[%s2 + $0x18] sm:$0xff]
    %v278 = vadd.f32 %v270, %v274
    %v279 = vadd.f32 %v271, %v275
    %v280 = vadd.f32 %v272, %v276
    %v281 = vadd.f32 %v273, %v277
    %v282 = vtanh.pop %v278
    %v283 = vtanh.pop %v279
    %v284 = vtanh.pop %v280
    %v285 = vtanh.pop %v281
    %v286 = vld [vmem:[%s7] sm:$0x1]
    %v288 = vlaneseq
    %v289 = vshrl.u32 %v288, 7
    %v290 = vsub.s32 0, %v289
    %v291 = vrot.slane %v286, %v290
    %v293 = vmul.f32 %v282, %v291
    %v294 = vmul.f32 %v283, %v291
    %v295 = vmul.f32 %v284, %v291
    %v296 = vmul.f32 %v285, %v291
    %v297 = vsel %vm56, %v293, 0.0
    %298 = vadd.xlane.f32.xlu0 %v297
    %v299 = vpop.xlane.xlu0 %298
    %v300 = vsel %vm56, %v294, 0.0
    %301 = vadd.xlane.f32.xlu0 %v300
    %v302 = vpop.xlane.xlu0 %301
    %v303 = vsel %vm56, %v295, 0.0
    %304 = vadd.xlane.f32.xlu0 %v303
    %v305 = vpop.xlane.xlu0 %304
    %v306 = vsel %vm56, %v296, 0.0
    %307 = vadd.xlane.f32.xlu0 %v306
    %v308 = vpop.xlane.xlu0 %307
    %v309 = vld [vmem:[%s4] sm:$0x1]
    %v310 = vld [vmem:[%s4 + $0x1] sm:$0x1]
    %vm311 = vcmp.gt.f32.partialorder %v309, 0.5
    %vm312 = vcmp.gt.f32.partialorder %v310, 0.5
    %v317 = vlaneseq
    %v318 = vshrl.u32 %v317, 7
    %v319 = vsub.s32 0, %v318
    %v320 = vrot.slane %v299, %v319
    %v321 = vlaneseq
    %v322 = vshrl.u32 %v321, 7
    %v323 = vsub.s32 1, %v322
    %v324 = vrot.slane %v299, %v323
    %v325 = vlaneseq
    %v326 = vshrl.u32 %v325, 7
    %v327 = vsub.s32 2, %v326
    %v328 = vrot.slane %v299, %v327
    %v329 = vlaneseq
    %v330 = vshrl.u32 %v329, 7
    %v331 = vsub.s32 3, %v330
    %v332 = vrot.slane %v299, %v331
    %v333 = vlaneseq
    %v334 = vshrl.u32 %v333, 7
    %v335 = vsub.s32 4, %v334
    %v336 = vrot.slane %v299, %v335
    %v337 = vlaneseq
    %v338 = vshrl.u32 %v337, 7
    %v339 = vsub.s32 5, %v338
    %v340 = vrot.slane %v299, %v339
    %v341 = vlaneseq
    %v342 = vshrl.u32 %v341, 7
    %v343 = vsub.s32 6, %v342
    %v344 = vrot.slane %v299, %v343
    %v345 = vlaneseq
    %v346 = vshrl.u32 %v345, 7
    %v347 = vsub.s32 7, %v346
    %v348 = vrot.slane %v299, %v347
    %v349 = vlaneseq
    %v350 = vshrl.u32 %v349, 7
    %v351 = vsub.s32 0, %v350
    %v352 = vrot.slane %v302, %v351
    %v353 = vlaneseq
    %v354 = vshrl.u32 %v353, 7
    %v355 = vsub.s32 1, %v354
    %v356 = vrot.slane %v302, %v355
    %v357 = vlaneseq
    %v358 = vshrl.u32 %v357, 7
    %v359 = vsub.s32 2, %v358
    %v360 = vrot.slane %v302, %v359
    %v361 = vlaneseq
    %v362 = vshrl.u32 %v361, 7
    %v363 = vsub.s32 3, %v362
    %v364 = vrot.slane %v302, %v363
    %v365 = vlaneseq
    %v366 = vshrl.u32 %v365, 7
    %v367 = vsub.s32 4, %v366
    %v368 = vrot.slane %v302, %v367
    %v369 = vlaneseq
    %v370 = vshrl.u32 %v369, 7
    %v371 = vsub.s32 5, %v370
    %v372 = vrot.slane %v302, %v371
    %v373 = vlaneseq
    %v374 = vshrl.u32 %v373, 7
    %v375 = vsub.s32 6, %v374
    %v376 = vrot.slane %v302, %v375
    %v377 = vlaneseq
    %v378 = vshrl.u32 %v377, 7
    %v379 = vsub.s32 7, %v378
    %v380 = vrot.slane %v302, %v379
    %v381 = vlaneseq
    %v382 = vshrl.u32 %v381, 7
    %v383 = vsub.s32 0, %v382
    %v384 = vrot.slane %v305, %v383
    %v385 = vlaneseq
    %v386 = vshrl.u32 %v385, 7
    %v387 = vsub.s32 1, %v386
    %v388 = vrot.slane %v305, %v387
    %v389 = vlaneseq
    %v390 = vshrl.u32 %v389, 7
    %v391 = vsub.s32 2, %v390
    %v392 = vrot.slane %v305, %v391
    %v393 = vlaneseq
    %v394 = vshrl.u32 %v393, 7
    %v395 = vsub.s32 3, %v394
    %v396 = vrot.slane %v305, %v395
    %v397 = vlaneseq
    %v398 = vshrl.u32 %v397, 7
    %v399 = vsub.s32 4, %v398
    %v400 = vrot.slane %v305, %v399
    %v401 = vlaneseq
    %v402 = vshrl.u32 %v401, 7
    %v403 = vsub.s32 5, %v402
    %v404 = vrot.slane %v305, %v403
    %v405 = vlaneseq
    %v406 = vshrl.u32 %v405, 7
    %v407 = vsub.s32 6, %v406
    %v408 = vrot.slane %v305, %v407
    %v409 = vlaneseq
    %v410 = vshrl.u32 %v409, 7
    %v411 = vsub.s32 7, %v410
    %v412 = vrot.slane %v305, %v411
    %v413 = vlaneseq
    %v414 = vshrl.u32 %v413, 7
    %v415 = vsub.s32 0, %v414
    %v416 = vrot.slane %v308, %v415
    %v417 = vlaneseq
    %v418 = vshrl.u32 %v417, 7
    %v419 = vsub.s32 1, %v418
    %v420 = vrot.slane %v308, %v419
    %v421 = vlaneseq
    %v422 = vshrl.u32 %v421, 7
    %v423 = vsub.s32 2, %v422
    %v424 = vrot.slane %v308, %v423
    %v425 = vlaneseq
    %v426 = vshrl.u32 %v425, 7
    %v427 = vsub.s32 3, %v426
    %v428 = vrot.slane %v308, %v427
    %v429 = vlaneseq
    %v430 = vshrl.u32 %v429, 7
    %v431 = vsub.s32 4, %v430
    %v432 = vrot.slane %v308, %v431
    %v433 = vlaneseq
    %v434 = vshrl.u32 %v433, 7
    %v435 = vsub.s32 5, %v434
    %v436 = vrot.slane %v308, %v435
    %v437 = vlaneseq
    %v438 = vshrl.u32 %v437, 7
    %v439 = vsub.s32 6, %v438
    %v440 = vrot.slane %v308, %v439
    %v441 = vlaneseq
    %v442 = vshrl.u32 %v441, 7
    %v443 = vsub.s32 7, %v442
    %v444 = vrot.slane %v308, %v443
    %v445 = vcombine.low %v320, %v324
    %v446 = vcombine.low %v328, %v332
    %v447 = vcombine.low %v336, %v340
    %v448 = vcombine.low %v344, %v348
    %v450 = vunpack.c.l.s4 1966171168
    %v451 = vunpack.c.0.s8 %v450
    %v452 = vlaneseq
    %v453 = vshrl.u32 %v452, 7
    %v454 = vsub.s32 %v451, %v453
    %v455 = vrot.slane %v445, %v454
    %v457 = vunpack.c.l.s4 1966171168
    %v458 = vunpack.c.0.s8 %v457
    %v459 = vlaneseq
    %v460 = vshrl.u32 %v459, 7
    %v461 = vsub.s32 %v458, %v460
    %v462 = vrot.slane %v446, %v461
    %v464 = vunpack.c.l.s4 1966171168
    %v465 = vunpack.c.0.s8 %v464
    %v466 = vlaneseq
    %v467 = vshrl.u32 %v466, 7
    %v468 = vsub.s32 %v465, %v467
    %v469 = vrot.slane %v447, %v468
    %v471 = vunpack.c.l.s4 1966171168
    %v472 = vunpack.c.0.s8 %v471
    %v473 = vlaneseq
    %v474 = vshrl.u32 %v473, 7
    %v475 = vsub.s32 %v472, %v474
    %v476 = vrot.slane %v448, %v475
    %v477 = vcombine.low %v455, %v462
    %v478 = vcombine.low %v469, %v476
    %v480 = vunpack.c.l.s4 1966171168
    %v481 = vunpack.c.0.s8 %v480
    %v482 = vlaneseq
    %v483 = vshrl.u32 %v482, 7
    %v484 = vsub.s32 %v481, %v483
    %v485 = vrot.slane %v477, %v484
    %v487 = vunpack.c.l.s4 1966171168
    %v488 = vunpack.c.0.s8 %v487
    %v489 = vlaneseq
    %v490 = vshrl.u32 %v489, 7
    %v491 = vsub.s32 %v488, %v490
    %v492 = vrot.slane %v478, %v491
    %v493 = vcombine.low %v485, %v492
    %v494 = vcombine.low %v352, %v356
    %v495 = vcombine.low %v360, %v364
    %v496 = vcombine.low %v368, %v372
    %v497 = vcombine.low %v376, %v380
    %v499 = vunpack.c.l.s4 1966171168
    %v500 = vunpack.c.0.s8 %v499
    %v501 = vlaneseq
    %v502 = vshrl.u32 %v501, 7
    %v503 = vsub.s32 %v500, %v502
    %v504 = vrot.slane %v494, %v503
    %v506 = vunpack.c.l.s4 1966171168
    %v507 = vunpack.c.0.s8 %v506
    %v508 = vlaneseq
    %v509 = vshrl.u32 %v508, 7
    %v510 = vsub.s32 %v507, %v509
    %v511 = vrot.slane %v495, %v510
    %v513 = vunpack.c.l.s4 1966171168
    %v514 = vunpack.c.0.s8 %v513
    %v515 = vlaneseq
    %v516 = vshrl.u32 %v515, 7
    %v517 = vsub.s32 %v514, %v516
    %v518 = vrot.slane %v496, %v517
    %v520 = vunpack.c.l.s4 1966171168
    %v521 = vunpack.c.0.s8 %v520
    %v522 = vlaneseq
    %v523 = vshrl.u32 %v522, 7
    %v524 = vsub.s32 %v521, %v523
    %v525 = vrot.slane %v497, %v524
    %v526 = vcombine.low %v504, %v511
    %v527 = vcombine.low %v518, %v525
    %v529 = vunpack.c.l.s4 1966171168
    %v530 = vunpack.c.0.s8 %v529
    %v531 = vlaneseq
    %v532 = vshrl.u32 %v531, 7
    %v533 = vsub.s32 %v530, %v532
    %v534 = vrot.slane %v526, %v533
    %v536 = vunpack.c.l.s4 1966171168
    %v537 = vunpack.c.0.s8 %v536
    %v538 = vlaneseq
    %v539 = vshrl.u32 %v538, 7
    %v540 = vsub.s32 %v537, %v539
    %v541 = vrot.slane %v527, %v540
    %v542 = vcombine.low %v534, %v541
    %v543 = vcombine.low %v384, %v388
    %v544 = vcombine.low %v392, %v396
    %v545 = vcombine.low %v400, %v404
    %v546 = vcombine.low %v408, %v412
    %v548 = vunpack.c.l.s4 1966171168
    %v549 = vunpack.c.0.s8 %v548
    %v550 = vlaneseq
    %v551 = vshrl.u32 %v550, 7
    %v552 = vsub.s32 %v549, %v551
    %v553 = vrot.slane %v543, %v552
    %v555 = vunpack.c.l.s4 1966171168
    %v556 = vunpack.c.0.s8 %v555
    %v557 = vlaneseq
    %v558 = vshrl.u32 %v557, 7
    %v559 = vsub.s32 %v556, %v558
    %v560 = vrot.slane %v544, %v559
    %v562 = vunpack.c.l.s4 1966171168
    %v563 = vunpack.c.0.s8 %v562
    %v564 = vlaneseq
    %v565 = vshrl.u32 %v564, 7
    %v566 = vsub.s32 %v563, %v565
    %v567 = vrot.slane %v545, %v566
    %v569 = vunpack.c.l.s4 1966171168
    %v570 = vunpack.c.0.s8 %v569
    %v571 = vlaneseq
    %v572 = vshrl.u32 %v571, 7
    %v573 = vsub.s32 %v570, %v572
    %v574 = vrot.slane %v546, %v573
    %v575 = vcombine.low %v553, %v560
    %v576 = vcombine.low %v567, %v574
    %v578 = vunpack.c.l.s4 1966171168
    %v579 = vunpack.c.0.s8 %v578
    %v580 = vlaneseq
    %v581 = vshrl.u32 %v580, 7
    %v582 = vsub.s32 %v579, %v581
    %v583 = vrot.slane %v575, %v582
    %v585 = vunpack.c.l.s4 1966171168
    %v586 = vunpack.c.0.s8 %v585
    %v587 = vlaneseq
    %v588 = vshrl.u32 %v587, 7
    %v589 = vsub.s32 %v586, %v588
    %v590 = vrot.slane %v576, %v589
    %v591 = vcombine.low %v583, %v590
    %v592 = vcombine.low %v416, %v420
    %v593 = vcombine.low %v424, %v428
    %v594 = vcombine.low %v432, %v436
    %v595 = vcombine.low %v440, %v444
    %v597 = vunpack.c.l.s4 1966171168
    %v598 = vunpack.c.0.s8 %v597
    %v599 = vlaneseq
    %v600 = vshrl.u32 %v599, 7
    %v601 = vsub.s32 %v598, %v600
    %v602 = vrot.slane %v592, %v601
    %v604 = vunpack.c.l.s4 1966171168
    %v605 = vunpack.c.0.s8 %v604
    %v606 = vlaneseq
    %v607 = vshrl.u32 %v606, 7
    %v608 = vsub.s32 %v605, %v607
    %v609 = vrot.slane %v593, %v608
    %v611 = vunpack.c.l.s4 1966171168
    %v612 = vunpack.c.0.s8 %v611
    %v613 = vlaneseq
    %v614 = vshrl.u32 %v613, 7
    %v615 = vsub.s32 %v612, %v614
    %v616 = vrot.slane %v594, %v615
    %v618 = vunpack.c.l.s4 1966171168
    %v619 = vunpack.c.0.s8 %v618
    %v620 = vlaneseq
    %v621 = vshrl.u32 %v620, 7
    %v622 = vsub.s32 %v619, %v621
    %v623 = vrot.slane %v595, %v622
    %v624 = vcombine.low %v602, %v609
    %v625 = vcombine.low %v616, %v623
    %v627 = vunpack.c.l.s4 1966171168
    %v628 = vunpack.c.0.s8 %v627
    %v629 = vlaneseq
    %v630 = vshrl.u32 %v629, 7
    %v631 = vsub.s32 %v628, %v630
    %v632 = vrot.slane %v624, %v631
    %v634 = vunpack.c.l.s4 1966171168
    %v635 = vunpack.c.0.s8 %v634
    %v636 = vlaneseq
    %v637 = vshrl.u32 %v636, 7
    %v638 = vsub.s32 %v635, %v637
    %v639 = vrot.slane %v625, %v638
    %v640 = vcombine.low %v632, %v639
    %641 = vset.pattern.permute.xlu0 0
    %642 = vperm.xlu0 %641, %v493
    %v643 = vpop.permute.xlu0 %642
    %644 = vset.pattern.permute.xlu0 0
    %645 = vperm.xlu0 %644, %v542
    %v646 = vpop.permute.xlu0 %645
    %647 = vset.pattern.permute.xlu0 0
    %648 = vperm.xlu0 %647, %v591
    %v649 = vpop.permute.xlu0 %648
    %650 = vset.pattern.permute.xlu0 0
    %651 = vperm.xlu0 %650, %v640
    %v652 = vpop.permute.xlu0 %651
    %v653 = vlaneseq
    %v654 = vand.u32 %v653, 127
    %v655 = vlaneseq
    %v656 = vshrl.u32 %v655, 7
    %v657 = vsub.s32 %v654, %v656
    %v658 = vrot.slane %v643, %v657
    %v659 = vadd.s32 %v654, 4294967288
    %v660 = vlaneseq
    %v661 = vshrl.u32 %v660, 7
    %v662 = vsub.s32 %v659, %v661
    %v663 = vrot.slane %v646, %v662
    %vm664 = vcmask 130112
    %v665 = vsel %vm664, %v663, %v658
    %v666 = vlaneseq
    %v667 = vshrl.u32 %v666, 7
    %v668 = vsub.s32 %v654, %v667
    %v669 = vrot.slane %v649, %v668
    %v670 = vlaneseq
    %v671 = vshrl.u32 %v670, 7
    %v672 = vsub.s32 %v659, %v671
    %v673 = vrot.slane %v652, %v672
    %v674 = vsel %vm664, %v673, %v669
    %v676 = vunpack.c.l.s4 1966171168
    %v677 = vunpack.c.0.s8 %v676
    %v678 = vlaneseq
    %v679 = vshrl.u32 %v678, 7
    %v680 = vsub.s32 %v677, %v679
    %v681 = vrot.slane %v665, %v680
    %v683 = vunpack.c.l.s4 1966171168
    %v684 = vunpack.c.0.s8 %v683
    %v685 = vlaneseq
    %v686 = vshrl.u32 %v685, 7
    %v687 = vsub.s32 %v684, %v686
    %v688 = vrot.slane %v681, %v687
    %v690 = vunpack.c.l.s4 1966171168
    %v691 = vunpack.c.0.s8 %v690
    %v692 = vlaneseq
    %v693 = vshrl.u32 %v692, 7
    %v694 = vsub.s32 %v691, %v693
    %v695 = vrot.slane %v674, %v694
    %v697 = vunpack.c.l.s4 1966171168
    %v698 = vunpack.c.0.s8 %v697
    %v699 = vlaneseq
    %v700 = vshrl.u32 %v699, 7
    %v701 = vsub.s32 %v698, %v700
    %v702 = vrot.slane %v695, %v701
    %v705 = vsel %vm311, -inf, %v688
    %v706 = vsel %vm312, -inf, %v702
    %v709 = vcombine.low %v705, %v706
    %v711 = vunpack.c.l.s4 1966171168
    %v712 = vunpack.c.0.s8 %v711
    %v713 = vlaneseq
    %v714 = vshrl.u32 %v713, 7
    %v715 = vsub.s32 %v712, %v714
    %v716 = vrot.slane %v709, %v715
    %v718 = vunpack.c.l.s4 1966171168
    %v719 = vunpack.c.0.s8 %v718
    %v720 = vlaneseq
    %v721 = vshrl.u32 %v720, 7
    %v722 = vsub.s32 %v719, %v721
    %v723 = vrot.slane %v716, %v722
    %vm725 = vcmask 123904
    %v726 = vsel %vm725, %v723, -inf
    %727 = vmax.xlane.f32.xlu0 %v726
    %v728 = vpop.xlane.xlu0 %727
    %v730 = vlaneseq
    %v731 = vshrl.u32 %v730, 7
    %v732 = vsub.s32 0, %v731
    %v733 = vrot.slane %v728, %v732
    %v734 = vlaneseq
    %v735 = vshrl.u32 %v734, 7
    %v736 = vsub.s32 1, %v735
    %v737 = vrot.slane %v728, %v736
    %v740 = vsub.f32 %v705, %v733
    %v741 = vsub.f32 %v706, %v737
    %v742 = vmul.f32 %v740, 1.442695
    %v743 = vpow.pop %v742
    %v744 = vmul.f32 %v741, 1.442695
    %v745 = vpow.pop %v744
    %v748 = vcombine.low %v743, %v745
    %v750 = vunpack.c.l.s4 1966171168
    %v751 = vunpack.c.0.s8 %v750
    %v752 = vlaneseq
    %v753 = vshrl.u32 %v752, 7
    %v754 = vsub.s32 %v751, %v753
    %v755 = vrot.slane %v748, %v754
    %v757 = vunpack.c.l.s4 1966171168
    %v758 = vunpack.c.0.s8 %v757
    %v759 = vlaneseq
    %v760 = vshrl.u32 %v759, 7
    %v761 = vsub.s32 %v758, %v760
    %v762 = vrot.slane %v755, %v761
    %v764 = vsel %vm725, %v762, 0.0
    %765 = vadd.xlane.f32.xlu0 %v764
    %v766 = vpop.xlane.xlu0 %765
    %v767 = vrcp.pop %v766
    %v769 = vlaneseq
    %v770 = vshrl.u32 %v769, 7
    %v771 = vsub.s32 0, %v770
    %v772 = vrot.slane %v767, %v771
    %v773 = vlaneseq
    %v774 = vshrl.u32 %v773, 7
    %v775 = vsub.s32 1, %v774
    %v776 = vrot.slane %v767, %v775
    %v779 = vmul.f32 %v743, %v772
    %v780 = vmul.f32 %v745, %v776
    %vm781 = vcmask 122880
    %782 = vst.msk [vmem:[#allocation4] sm:$0x1] %vm781, %v779
    %783 = vst.msk [vmem:[#allocation4 + $0x1] sm:$0x1] %vm781, %v780
    %v784 = vld [vmem:[%s3] sm:$0xff]
    %v785 = vld [vmem:[%s3 + $0x8] sm:$0xff]
    %v786 = vld [vmem:[%s3 + $0x10] sm:$0xff]
    %v787 = vld [vmem:[%s3 + $0x18] sm:$0xff]
    %vm788 = vcmask 130048
    %v790 = vsel %vm788, %v779, 0
    %792 = vmatprep.subr.mxu0 0.0
    %793 = vmatpush1.msra.mxu0 %v784
    %794 = vmatprep.subr.mxu0 0.0
    %795 = vmatpush1.msra.mxu0 %v785
    %796 = vmatprep.subr.mxu0 0.0
    %797 = vmatpush1.msra.mxu0 0.0
    %798 = vmatprep.subr.mxu0 0.0
    %799 = vmatpush1.msra.mxu0 0.0
    %800 = vmatprep.subr.mxu0 0.0
    %801 = vmatpush1.msra.mxu0 0.0
    %802 = vmatprep.subr.mxu0 0.0
    %803 = vmatpush1.msra.mxu0 0.0
    %804 = vmatprep.subr.mxu0 0.0
    %805 = vmatpush1.msra.mxu0 0.0
    %806 = vmatprep.subr.mxu0 0.0
    %807 = vmatpush1.msra.mxu0 0.0
    %808 = vmatprep.subr.mxu0 0.0
    %809 = vmatpush1.msra.mxu0 0.0
    %810 = vmatprep.subr.mxu0 0.0
    %811 = vmatpush1.msra.mxu0 0.0
    %812 = vmatprep.subr.mxu0 0.0
    %813 = vmatpush1.msra.mxu0 0.0
    %814 = vmatprep.subr.mxu0 0.0
    %815 = vmatpush1.msra.mxu0 0.0
    %816 = vmatprep.subr.mxu0 0.0
    %817 = vmatpush1.msra.mxu0 0.0
    %818 = vmatprep.subr.mxu0 0.0
    %819 = vmatpush1.msra.mxu0 0.0
    %820 = vmatprep.subr.mxu0 0.0
    %821 = vmatpush1.msra.mxu0 0.0
    %822 = vmatprep.subr.mxu0 0.0
    %823 = vmatpush1.msra.mxu0 0.0
    %824 = vmatprep.subr.mxu0 0.0
    %825 = vmatpush1.msra.mxu0 0.0
    %826 = vmatprep.subr.mxu0 0.0
    %827 = vmatpush1.msra.mxu0 0.0
    %828 = vmatprep.subr.mxu0 0.0
    %829 = vmatpush1.msra.mxu0 0.0
    %830 = vmatprep.subr.mxu0 0.0
    %831 = vmatpush1.msra.mxu0 0.0
    %832 = vmatprep.subr.mxu0 0.0
    %833 = vmatpush1.msra.mxu0 0.0
    %834 = vmatprep.subr.mxu0 0.0
    %835 = vmatpush1.msra.mxu0 0.0
    %836 = vmatprep.subr.mxu0 0.0
    %837 = vmatpush1.msra.mxu0 0.0
    %838 = vmatprep.subr.mxu0 0.0
    %839 = vmatpush1.msra.mxu0 0.0
    %840 = vmatprep.subr.mxu0 0.0
    %841 = vmatpush1.msra.mxu0 0.0
    %842 = vmatprep.subr.mxu0 0.0
    %843 = vmatpush1.msra.mxu0 0.0
    %844 = vmatprep.subr.mxu0 0.0
    %845 = vmatpush1.msra.mxu0 0.0
    %846 = vmatprep.subr.mxu0 0.0
    %847 = vmatpush1.msra.mxu0 0.0
    %848 = vmatprep.subr.mxu0 0.0
    %849 = vmatpush1.msra.mxu0 0.0
    %850 = vmatprep.subr.mxu0 0.0
    %851 = vmatpush1.msra.mxu0 0.0
    %852 = vmatprep.subr.mxu0 0.0
    %853 = vmatpush1.msra.mxu0 0.0
    %854 = vmatprep.subr.mxu0 0.0
    %855 = vmatpush1.msra.mxu0 0.0
    %856 = vmatprep.mubr.f32.mxu0 0.0
    %857 = vmatmul.mubr.f32.gmra.mrb[0].mxu0 %v790
    %v858 = vpop.f32.mrb[0].mxu0
    %v859 = vadd.f32 0.0, %v858
    %v860 = vpop.f32.mrb[0].mxu0
    %861 = vdwg.mxu0
    %v863 = vsel %vm788, %v780, 0
    %865 = vmatprep.subr.mxu0 0.0
    %866 = vmatpush1.msra.mxu0 %v786
    %867 = vmatprep.subr.mxu0 0.0
    %868 = vmatpush1.msra.mxu0 %v787
    %869 = vmatprep.subr.mxu0 0.0
    %870 = vmatpush1.msra.mxu0 0.0
    %871 = vmatprep.subr.mxu0 0.0
    %872 = vmatpush1.msra.mxu0 0.0
    %873 = vmatprep.subr.mxu0 0.0
    %874 = vmatpush1.msra.mxu0 0.0
    %875 = vmatprep.subr.mxu0 0.0
    %876 = vmatpush1.msra.mxu0 0.0
    %877 = vmatprep.subr.mxu0 0.0
    %878 = vmatpush1.msra.mxu0 0.0
    %879 = vmatprep.subr.mxu0 0.0
    %880 = vmatpush1.msra.mxu0 0.0
    %881 = vmatprep.subr.mxu0 0.0
    %882 = vmatpush1.msra.mxu0 0.0
    %883 = vmatprep.subr.mxu0 0.0
    %884 = vmatpush1.msra.mxu0 0.0
    %885 = vmatprep.subr.mxu0 0.0
    %886 = vmatpush1.msra.mxu0 0.0
    %887 = vmatprep.subr.mxu0 0.0
    %888 = vmatpush1.msra.mxu0 0.0
    %889 = vmatprep.subr.mxu0 0.0
    %890 = vmatpush1.msra.mxu0 0.0
    %891 = vmatprep.subr.mxu0 0.0
    %892 = vmatpush1.msra.mxu0 0.0
    %893 = vmatprep.subr.mxu0 0.0
    %894 = vmatpush1.msra.mxu0 0.0
    %895 = vmatprep.subr.mxu0 0.0
    %896 = vmatpush1.msra.mxu0 0.0
    %897 = vmatprep.subr.mxu0 0.0
    %898 = vmatpush1.msra.mxu0 0.0
    %899 = vmatprep.subr.mxu0 0.0
    %900 = vmatpush1.msra.mxu0 0.0
    %901 = vmatprep.subr.mxu0 0.0
    %902 = vmatpush1.msra.mxu0 0.0
    %903 = vmatprep.subr.mxu0 0.0
    %904 = vmatpush1.msra.mxu0 0.0
    %905 = vmatprep.subr.mxu0 0.0
    %906 = vmatpush1.msra.mxu0 0.0
    %907 = vmatprep.subr.mxu0 0.0
    %908 = vmatpush1.msra.mxu0 0.0
    %909 = vmatprep.subr.mxu0 0.0
    %910 = vmatpush1.msra.mxu0 0.0
    %911 = vmatprep.subr.mxu0 0.0
    %912 = vmatpush1.msra.mxu0 0.0
    %913 = vmatprep.subr.mxu0 0.0
    %914 = vmatpush1.msra.mxu0 0.0
    %915 = vmatprep.subr.mxu0 0.0
    %916 = vmatpush1.msra.mxu0 0.0
    %917 = vmatprep.subr.mxu0 0.0
    %918 = vmatpush1.msra.mxu0 0.0
    %919 = vmatprep.subr.mxu0 0.0
    %920 = vmatpush1.msra.mxu0 0.0
    %921 = vmatprep.subr.mxu0 0.0
    %922 = vmatpush1.msra.mxu0 0.0
    %923 = vmatprep.subr.mxu0 0.0
    %924 = vmatpush1.msra.mxu0 0.0
    %925 = vmatprep.subr.mxu0 0.0
    %926 = vmatpush1.msra.mxu0 0.0
    %927 = vmatprep.subr.mxu0 0.0
    %928 = vmatpush1.msra.mxu0 0.0
    %929 = vmatprep.mubr.f32.mxu0 0.0
    %930 = vmatmul.mubr.f32.gmra.mrb[0].mxu0 %v863
    %v931 = vpop.f32.mrb[0].mxu0
    %v932 = vadd.f32 0.0, %v931
    %v933 = vpop.f32.mrb[0].mxu0
    %934 = vdwg.mxu0
    %vm935 = vcmask 516096
    %936 = vst.msk [vmem:[#allocation2] sm:$0x1] %vm935, %v859
    %937 = vst.msk [vmem:[#allocation2 + $0x1] sm:$0x1] %vm935, %v932
    // Predicated region
    $region34: #{attention_forward.1} parent=1 // pred_check
      _
    $region35: #{attention_forward.1} parent=1 // pred_check_branch
      %939 = sbr.rel (0) target = $region37
    $region36: #{attention_forward.1} parent=1 // pred_region
      %s941 = ssub.s32 32, 32
      %942 = vsyncadd [#allocation3], %s941
      %s943 = sshll.u32 [#allocation2], 4
      %s944 = int_to_ptr.vmem [resolvable:$true] %s943
      %949 = dma.vmem_to_hbm [thread:$0]  %s944, 32, %s8, [#allocation3], 16, 16, 1
    $region37: #{attention_forward.1} parent=1 // pred_fallthru
      _
    // Predicated region
    $region38: #{attention_forward.1} parent=1 // pred_check
      _
    $region39: #{attention_forward.1} parent=1 // pred_check_branch
      %951 = sbr.rel (0) target = $region41
    $region40: #{attention_forward.1} parent=1 // pred_region
      %s953 = ssub.s32 32, 32
      %954 = vsyncadd [#allocation5], %s953
      %s955 = sshll.u32 [#allocation4], 4
      %s956 = int_to_ptr.vmem [resolvable:$true] %s955
      %961 = dma.vmem_to_hbm [thread:$0]  %s956, 32, %s9, [#allocation5], 16, 16, 1
    $region41: #{attention_forward.1} parent=1 // pred_fallthru
      _
    // Predicated region
    $region42: #{attention_forward.1} parent=1 // pred_check
      _
    $region43: #{attention_forward.1} parent=1 // pred_check_branch
      %963 = sbr.rel (0) target = $region45
    $region44: #{attention_forward.1} parent=1 // pred_region
      %964 = dma.done [#allocation3], 32
    $region45: #{attention_forward.1} parent=1 // pred_fallthru
      _
    // Predicated region
    $region46: #{attention_forward.1} parent=1 // pred_check
      _
    $region47: #{attention_forward.1} parent=1 // pred_check_branch
      %966 = sbr.rel (0) target = $region49
    $region48: #{attention_forward.1} parent=1 // pred_region
      %967 = dma.done [#allocation5], 32
    $region49: #{attention_forward.1} parent=1 // pred_fallthru
      _
    %968 = vsyncpa [#allocation3], 1
    %969 = vsyncpa [#allocation5], 1

</llo_original>
